<compile_context>
chip_gen: v5e
topology: v5e:2x2
jax: 0.10.0
libtpu: 0.0.40
codegen_flags: <defaults>
</compile_context>

<pallas_src>
import jax
import jax.numpy as jnp
from jax.experimental import pallas as pl
from jax.experimental.pallas import tpu as pltpu


def mlp_kernel(x_ref, w1_ref, b1_ref, w2_ref, b2_ref, o_ref):
    # x_ref : (1, N)   batch on lanes (lane-dense)
    # w1_ref: (H, 1)   hidden weights (column), b1_ref: (H, 1)
    # w2_ref: (H, 1)   output weights (column), b2_ref: (1, 1)
    # o_ref : (1, N)
    #
    # Layer 1 (Linear F=1 -> H, then ReLU) as a VPU broadcast outer product:
    #   h[hid, n] = relu(w1[hid] * x[n] + b1[hid])            shape (H, N)
    h = jnp.maximum(w1_ref[...] * x_ref[...] + b1_ref[...], 0.0)

    # Layer 2 (Linear H -> 1) as VPU multiply + XLU cross-sublane reduction:
    #   y[n] = sum_hid(h[hid, n] * w2[hid]) + b2              shape (1, N)
    y = jnp.sum(h * w2_ref[...], axis=0, keepdims=True) + b2_ref[...]

    o_ref[...] = y.astype(o_ref.dtype)


def net_forward(x, w1, b1, w2, b2):
    """Forward pass of Net.

    x : (N, F) float32, with F == 1
    w1: (F, H) float32 (pre-transposed vs torch's (H, F))
    b1: (H,)   float32
    w2: (H, O) float32 (pre-transposed vs torch's (O, H)), with O == 1
    b2: (O,)   float32
    Returns (N, O) float32.
    """
    n, f = x.shape
    _, h = w1.shape
    _, o = w2.shape
    assert f == 1 and o == 1, "kernel is specialized for n_feature=1, n_output=1"

    # Lane-dense layout: pad batch to a multiple of 128 and put it on lanes.
    n_pad = -(-n // 128) * 128
    x_row = jnp.zeros((1, n_pad), jnp.float32).at[0, :n].set(x[:, 0].astype(jnp.float32))

    # Column-shaped params: hidden dim on sublanes.
    w1_col = w1.reshape(h, 1).astype(jnp.float32)
    b1_col = b1.reshape(h, 1).astype(jnp.float32)
    w2_col = w2.reshape(h, 1).astype(jnp.float32)
    b2_11 = b2.reshape(1, 1).astype(jnp.float32)

    vmem = pl.BlockSpec(memory_space=pltpu.MemorySpace.VMEM)
    y_row = pl.pallas_call(
        mlp_kernel,
        out_shape=jax.ShapeDtypeStruct((1, n_pad), jnp.float32),
        in_specs=[vmem, vmem, vmem, vmem, vmem],
        out_specs=vmem,
    )(x_row, w1_col, b1_col, w2_col, b2_11)

    # Layout plumbing back to the PyTorch (N, 1) convention.
    return y_row[0, :n].reshape(n, 1)


def init_params(key, n_feature, n_hidden, n_output):
    """Deterministic init mimicking torch.nn.Linear (uniform +/- 1/sqrt(fan_in))."""
    k1, k2, k3, k4 = jax.random.split(key, 4)
    bound1 = 1.0 / jnp.sqrt(jnp.float32(n_feature))
    bound2 = 1.0 / jnp.sqrt(jnp.float32(n_hidden))
    # Stored already transposed: (in, out) so reference math is x @ W.
    w1 = jax.random.uniform(k1, (n_feature, n_hidden), jnp.float32, -bound1, bound1)
    b1 = jax.random.uniform(k2, (n_hidden,), jnp.float32, -bound1, bound1)
    w2 = jax.random.uniform(k3, (n_hidden, n_output), jnp.float32, -bound2, bound2)
    b2 = jax.random.uniform(k4, (n_output,), jnp.float32, -bound2, bound2)
    return w1, b1, w2, b2


if __name__ == "__main__":
    # Small shapes consistent with the module: x = unsqueeze(linspace(-1,1,N), 1)
    N, n_feature, n_hidden, n_output = 256, 1, 32, 1

    key = jax.random.PRNGKey(0)
    _, key_p = jax.random.split(key)

    # Input analogous to torch.unsqueeze(torch.linspace(-1, 1, N), dim=1)
    x = jnp.linspace(-1.0, 1.0, N, dtype=jnp.float32).reshape(N, n_feature)

    w1, b1, w2, b2 = init_params(key_p, n_feature, n_hidden, n_output)

    y = net_forward(x, w1, b1, w2, b2)
    jax.block_until_ready(y)

    # Pure-JAX reference check of the forward semantics.
    h_ref = jnp.maximum(x @ w1 + b1, 0.0)
    y_ref = h_ref @ w2 + b2
    assert y.shape == (N, n_output)
    assert jnp.allclose(y, y_ref, atol=1e-5, rtol=1e-5)

    print("KERNEL_OK")
</pallas_src>

<mosaic_0001>
module attributes {stable_mosaic.version = 11 : i64} {
  func.func @mlp_kernel(%arg0: memref<1x256xf32, #tpu.memory_space<vmem>>, %arg1: memref<32x1xf32, #tpu.memory_space<vmem>>, %arg2: memref<32x1xf32, #tpu.memory_space<vmem>>, %arg3: memref<32x1xf32, #tpu.memory_space<vmem>>, %arg4: memref<1x1xf32, #tpu.memory_space<vmem>>, %arg5: memref<1x256xf32, #tpu.memory_space<vmem>>) attributes {dimension_semantics = [], scalar_prefetch = 0 : i64, scratch_operands = 0 : i64, tpu.core_type = #tpu.core_type<tc>} {
    %c0 = arith.constant 0 : index
    %c0_0 = arith.constant 0 : index
    %0 = vector.load %arg1[%c0, %c0_0] : memref<32x1xf32, #tpu.memory_space<vmem>>, vector<32x1xf32>
    %c0_1 = arith.constant 0 : index
    %c0_2 = arith.constant 0 : index
    %1 = vector.load %arg0[%c0_1, %c0_2] : memref<1x256xf32, #tpu.memory_space<vmem>>, vector<1x256xf32>
    %2 = vector.broadcast %0 : vector<32x1xf32> to vector<32x256xf32>
    %3 = vector.broadcast %1 : vector<1x256xf32> to vector<32x256xf32>
    %4 = arith.mulf %2, %3 : vector<32x256xf32>
    %c0_3 = arith.constant 0 : index
    %c0_4 = arith.constant 0 : index
    %5 = vector.load %arg2[%c0_3, %c0_4] : memref<32x1xf32, #tpu.memory_space<vmem>>, vector<32x1xf32>
    %6 = vector.broadcast %5 : vector<32x1xf32> to vector<32x256xf32>
    %7 = arith.addf %4, %6 : vector<32x256xf32>
    %cst = arith.constant 0.000000e+00 : f32
    %8 = vector.broadcast %cst : f32 to vector<32x256xf32>
    %9 = arith.maximumf %7, %8 : vector<32x256xf32>
    %c0_5 = arith.constant 0 : index
    %c0_6 = arith.constant 0 : index
    %10 = vector.load %arg3[%c0_5, %c0_6] : memref<32x1xf32, #tpu.memory_space<vmem>>, vector<32x1xf32>
    %11 = vector.broadcast %10 : vector<32x1xf32> to vector<32x256xf32>
    %12 = arith.mulf %9, %11 : vector<32x256xf32>
    %cst_7 = arith.constant dense<0.000000e+00> : vector<256xf32>
    %13 = vector.multi_reduction <add>, %12, %cst_7 [0] : vector<32x256xf32> to vector<256xf32>
    %14 = vector.shape_cast %13 : vector<256xf32> to vector<1x256xf32>
    %c0_8 = arith.constant 0 : index
    %c0_9 = arith.constant 0 : index
    %15 = vector.load %arg4[%c0_8, %c0_9] : memref<1x1xf32, #tpu.memory_space<vmem>>, vector<1x1xf32>
    %16 = vector.broadcast %15 : vector<1x1xf32> to vector<1x256xf32>
    %17 = arith.addf %14, %16 : vector<1x256xf32>
    %c0_10 = arith.constant 0 : index
    %c0_11 = arith.constant 0 : index
    %18 = vector.load %arg5[%c0_10, %c0_11] : memref<1x256xf32, #tpu.memory_space<vmem>>, vector<1x256xf32>
    tpu.vector_store %arg5[%c0_10, %c0_11], %17 {strides = array<i32>} : memref<1x256xf32, #tpu.memory_space<vmem>>, vector<1x256xf32>,
    return
  }
}

</mosaic_0001>

<llo_original>
// kernel: tpu_custom_call.1
$region0: #{tpu_custom_call.1}
  #allocation0 [shape = 'u32[]', space=smem, size = 0x4, offset = 0x4, fixed_abs, tag = 'smem constant byte address 0x4 - core index']
  #allocation1 [shape = 'u32[72,128]{1,0:T(1,128)}', space=vmem, size = 0x9000, scoped, tag = 'internal scratch']
  #allocation2 [shape = 'f32[1,1]{1,0:T(1,128)S(1)}', space=vmem, size = 0x200, scoped, tag = 'scoped memory for tpu_custom_call.1']
  %s0 = inlined_call_operand.vmem [shape: f32[1,256], index: 0, kind: input, shape index: {}]
  %s1 = inlined_call_operand.vmem [shape: f32[32,1], index: 1, kind: input, shape index: {}]
  %s2 = inlined_call_operand.vmem [shape: f32[32,1], index: 2, kind: input, shape index: {}]
  %s3 = inlined_call_operand.vmem [shape: f32[32,1], index: 3, kind: input, shape index: {}]
  %s4 = inlined_call_operand.<no memory space> [shape: f32[1,1], index: 4, kind: input, shape index: {}]
  %s5 = inlined_call_operand.hbm [shape: f32[1,256], index: 5, kind: output, shape index: {}]
  %s6 = sld [smem:[#allocation0]]
  $region30: #{tpu_custom_call.1} parent=0
    _
  %s8 = ssub.s32 1, %s6
  %s9 = scalar_select 0, %s8, %s6
  %v10 = vstv %s4
  %11 = vst [vmem:[#allocation2] sm:$0x1] %v10
  $region1: #{tpu_custom_call.1} parent=0
    #allocation3 [shape = 'u8[1024]{0}', space=vmem, size = 0x400, scoped, tag = 'output window, operand 0, single buffered']
    #allocation4 [shape = 's32[1]{0}', space=sflag, size = 0x4, scoped, tag = 'scoped memory for tpu_custom_call.1']
    %12 = vsyncpa [#allocation4], 0
    // Predicated region
    $region2: #{tpu_custom_call.1} parent=1 // pred_check
      _
    $region3: #{tpu_custom_call.1} parent=1 // pred_check_branch
      %14 = sbr.rel (0) target = $region5
    $region4: #{tpu_custom_call.1} parent=1 // pred_region
      _
    $region5: #{tpu_custom_call.1} parent=1 // pred_fallthru
      _
    // Predicated region
    $region6: #{tpu_custom_call.1} parent=1 // pred_check
      _
    $region7: #{tpu_custom_call.1} parent=1 // pred_check_branch
      %16 = sbr.rel (0) target = $region9
    $region8: #{tpu_custom_call.1} parent=1 // pred_region
      _
    $region9: #{tpu_custom_call.1} parent=1 // pred_fallthru
      _
    // Predicated region
    $region10: #{tpu_custom_call.1} parent=1 // pred_check
      _
    $region11: #{tpu_custom_call.1} parent=1 // pred_check_branch
      %18 = sbr.rel (0) target = $region13
    $region12: #{tpu_custom_call.1} parent=1 // pred_region
      _
    $region13: #{tpu_custom_call.1} parent=1 // pred_fallthru
      _
    // Predicated region
    $region14: #{tpu_custom_call.1} parent=1 // pred_check
      _
    $region15: #{tpu_custom_call.1} parent=1 // pred_check_branch
      %20 = sbr.rel (0) target = $region17
    $region16: #{tpu_custom_call.1} parent=1 // pred_region
      _
    $region17: #{tpu_custom_call.1} parent=1 // pred_fallthru
      _
    // Predicated region
    $region18: #{tpu_custom_call.1} parent=1 // pred_check
      _
    $region19: #{tpu_custom_call.1} parent=1 // pred_check_branch
      %22 = sbr.rel (0) target = $region21
    $region20: #{tpu_custom_call.1} parent=1 // pred_region
      _
    $region21: #{tpu_custom_call.1} parent=1 // pred_fallthru
      _
    %v23 = vld [vmem:[%s1] sm:$0xff]
    %v24 = vld [vmem:[%s1 + $0x8] sm:$0xff]
    %v25 = vld [vmem:[%s1 + $0x10] sm:$0xff]
    %v26 = vld [vmem:[%s1 + $0x18] sm:$0xff]
    %v27 = vld [vmem:[%s0] sm:$0x3]
    %29 = vset.pattern.permute.xlu0 0
    %30 = vperm.xlu0 %29, %v23
    %v31 = vpop.permute.xlu0 %30
    %34 = vset.pattern.permute.xlu0 0
    %35 = vperm.xlu0 %34, %v24
    %v36 = vpop.permute.xlu0 %35
    %39 = vset.pattern.permute.xlu0 0
    %40 = vperm.xlu0 %39, %v25
    %v41 = vpop.permute.xlu0 %40
    %44 = vset.pattern.permute.xlu0 0
    %45 = vperm.xlu0 %44, %v26
    %v46 = vpop.permute.xlu0 %45
    %v49 = vperm.slane %v27, 0
    %v50 = vperm.slane %v27, 1
    %v53 = vmul.f32 %v31, %v49
    %v54 = vmul.f32 %v31, %v50
    %v55 = vmul.f32 %v36, %v49
    %v56 = vmul.f32 %v36, %v50
    %v57 = vmul.f32 %v41, %v49
    %v58 = vmul.f32 %v41, %v50
    %v59 = vmul.f32 %v46, %v49
    %v60 = vmul.f32 %v46, %v50
    %v61 = vld [vmem:[%s2] sm:$0xff]
    %v62 = vld [vmem:[%s2 + $0x8] sm:$0xff]
    %v63 = vld [vmem:[%s2 + $0x10] sm:$0xff]
    %v64 = vld [vmem:[%s2 + $0x18] sm:$0xff]
    %66 = vset.pattern.permute.xlu0 0
    %67 = vperm.xlu0 %66, %v61
    %v68 = vpop.permute.xlu0 %67
    %71 = vset.pattern.permute.xlu0 0
    %72 = vperm.xlu0 %71, %v62
    %v73 = vpop.permute.xlu0 %72
    %76 = vset.pattern.permute.xlu0 0
    %77 = vperm.xlu0 %76, %v63
    %v78 = vpop.permute.xlu0 %77
    %81 = vset.pattern.permute.xlu0 0
    %82 = vperm.xlu0 %81, %v64
    %v83 = vpop.permute.xlu0 %82
    %v85 = vadd.f32 %v53, %v68
    %v86 = vadd.f32 %v54, %v68
    %v87 = vadd.f32 %v55, %v73
    %v88 = vadd.f32 %v56, %v73
    %v89 = vadd.f32 %v57, %v78
    %v90 = vadd.f32 %v58, %v78
    %v91 = vadd.f32 %v59, %v83
    %v92 = vadd.f32 %v60, %v83
    %v93 = vmax.f32 %v85, 0.0
    %v94 = vmax.f32 %v86, 0.0
    %v95 = vmax.f32 %v87, 0.0
    %v96 = vmax.f32 %v88, 0.0
    %v97 = vmax.f32 %v89, 0.0
    %v98 = vmax.f32 %v90, 0.0
    %v99 = vmax.f32 %v91, 0.0
    %v100 = vmax.f32 %v92, 0.0
    %v101 = vld [vmem:[%s3] sm:$0xff]
    %v102 = vld [vmem:[%s3 + $0x8] sm:$0xff]
    %v103 = vld [vmem:[%s3 + $0x10] sm:$0xff]
    %v104 = vld [vmem:[%s3 + $0x18] sm:$0xff]
    %106 = vset.pattern.permute.xlu0 0
    %107 = vperm.xlu0 %106, %v101
    %v108 = vpop.permute.xlu0 %107
    %111 = vset.pattern.permute.xlu0 0
    %112 = vperm.xlu0 %111, %v102
    %v113 = vpop.permute.xlu0 %112
    %116 = vset.pattern.permute.xlu0 0
    %117 = vperm.xlu0 %116, %v103
    %v118 = vpop.permute.xlu0 %117
    %121 = vset.pattern.permute.xlu0 0
    %122 = vperm.xlu0 %121, %v104
    %v123 = vpop.permute.xlu0 %122
    %v125 = vmul.f32 %v93, %v108
    %v126 = vmul.f32 %v94, %v108
    %v127 = vmul.f32 %v95, %v113
    %v128 = vmul.f32 %v96, %v113
    %v129 = vmul.f32 %v97, %v118
    %v130 = vmul.f32 %v98, %v118
    %v131 = vmul.f32 %v99, %v123
    %v132 = vmul.f32 %v100, %v123
    %v133 = vadd.f32 %v125, %v127
    %v134 = vadd.f32 %v133, %v129
    %v135 = vadd.f32 %v134, %v131
    %v136 = vrot.slane %v135, 4
    %v137 = vadd.f32 %v135, %v136
    %v138 = vrot.slane %v137, 2
    %v139 = vadd.f32 %v137, %v138
    %v140 = vrot.slane %v139, 1
    %v141 = vadd.f32 %v139, %v140
    %v142 = vadd.f32 %v126, %v128
    %v143 = vadd.f32 %v142, %v130
    %v144 = vadd.f32 %v143, %v132
    %v145 = vrot.slane %v144, 4
    %v146 = vadd.f32 %v144, %v145
    %v147 = vrot.slane %v146, 2
    %v148 = vadd.f32 %v146, %v147
    %v149 = vrot.slane %v148, 1
    %v150 = vadd.f32 %v148, %v149
    %v151 = vld [vmem:[#allocation2] sm:$0x1]
    %153 = vset.pattern.permute.xlu0 0
    %154 = vperm.xlu0 %153, %v151
    %v155 = vpop.permute.xlu0 %154
    %v157 = vperm.slane %v155, 0
    %v158 = vadd.f32 %v141, %v157
    %v159 = vadd.f32 %v150, %v157
    %v162 = vrot.slane %v159, 7
    %vm163 = vcmask 1040384
    %v164 = vsel %vm163, %v158, %v162
    %v166 = vlaneseq
    %vm167 = vcmp.ge.s32.totalorder %v166, 0
    %vm168 = vcmp.lt.s32.totalorder %v166, 256
    %vm169 = vmand %vm167, %vm168
    %170 = vst.msk [vmem:[#allocation3] sm:$0x3] %vm169, %v164
    // Predicated region
    $region22: #{tpu_custom_call.1} parent=1 // pred_check
      _
    $region23: #{tpu_custom_call.1} parent=1 // pred_check_branch
      %172 = sbr.rel (0) target = $region25
    $region24: #{tpu_custom_call.1} parent=1 // pred_region
      %174 = vsyncadd [#allocation4], 0
      %s176 = sshll.u32 [#allocation3], 4
      %s177 = int_to_ptr.vmem [resolvable:$true] %s176
      %s178 = sshll.u32 %s5, 4
      %s179 = int_to_ptr.hbm [resolvable:$true] %s178
      %181 = dma.vmem_to_hbm [thread:$0]  %s177, 32, %s179, [#allocation4]
    $region25: #{tpu_custom_call.1} parent=1 // pred_fallthru
      _
    // Predicated region
    $region26: #{tpu_custom_call.1} parent=1 // pred_check
      _
    $region27: #{tpu_custom_call.1} parent=1 // pred_check_branch
      %183 = sbr.rel (0) target = $region29
    $region28: #{tpu_custom_call.1} parent=1 // pred_region
      %185 = dma.done [#allocation4], 32
    $region29: #{tpu_custom_call.1} parent=1 // pred_fallthru
      _
    %186 = vsyncpa [#allocation4], 1

</llo_original>
